<compile_context>
chip_gen: v7x
topology: tpu7x:2x2x1
jax: 0.10.0
libtpu: 0.0.40
codegen_flags: <defaults>
</compile_context>

<pallas_src>
import functools

import jax
import jax.numpy as jnp
from jax.experimental import pallas as pl
from jax.experimental.pallas import tpu as pltpu


LANE = 128      # vreg lane width (MXU-aligned on v5e, fine on v6e/v7x)
SUBLANE = 8     # vreg sublane width


def _round_up(v, m):
    return ((v + m - 1) // m) * m


# ---------------------------------------------------------------------------
# Fused kernel: full MLP for one batch tile.
#   refs = (x_ref, t_ref, w1, b1, w2, b2, ..., wL, bL, o_ref)
#   x_ref: [TM, dx]   t_ref: [TM, dt]
#   w_i  : [in_pad_i, out_pad_i]   (already transposed + zero padded)
#   b_i  : [1, out_pad_i]
#   o_ref: [TM, out_pad_L]
# ---------------------------------------------------------------------------
def _pinn_fused_kernel(*refs, num_layers, dx, dt):
    x_ref, t_ref = refs[0], refs[1]
    o_ref = refs[-1]
    wb = refs[2:-1]

    w1, b1 = wb[0], wb[1]

    # ---- Layer 0: contraction width dx+dt (tiny) -> VPU multiply-adds -------
    h = b1[...]                                       # [1, H1] -> broadcasts
    for c in range(dx):
        h = h + x_ref[:, c:c + 1] * w1[c:c + 1, :]
    for c in range(dt):
        h = h + t_ref[:, c:c + 1] * w1[dx + c:dx + c + 1, :]
    if num_layers > 1:
        h = jnp.tanh(h)

    # ---- Remaining layers: MXU matmuls on 128-aligned tiles -----------------
    for li in range(1, num_layers):
        w, b = wb[2 * li], wb[2 * li + 1]
        y = jnp.dot(h, w[...], preferred_element_type=jnp.float32) + b[...]
        h = jnp.tanh(y) if li < num_layers - 1 else y

    o_ref[...] = h.astype(o_ref.dtype)


# ---------------------------------------------------------------------------
# Parameter init (deterministic, mimics nn.Linear uniform(-1/sqrt(in), 1/sqrt(in)))
# Weights kept in PyTorch layout [out_features, in_features].
# ---------------------------------------------------------------------------
def init_pinn_params(layers, key):
    params = []
    for i in range(len(layers) - 1):
        key, kw, kb = jax.random.split(key, 3)
        fan_in = layers[i]
        bound = 1.0 / jnp.sqrt(jnp.float32(fan_in))
        w = jax.random.uniform(
            kw, (layers[i + 1], layers[i]), jnp.float32, -bound, bound
        )
        b = jax.random.uniform(kb, (layers[i + 1],), jnp.float32, -bound, bound)
        params.append((w, b))
    key, kk = jax.random.split(key)
    # kappa is a learnable parameter in the PyTorch model but unused in forward.
    kappa = jax.random.uniform(kk, (1,), jnp.float32)
    return params, kappa


# ---------------------------------------------------------------------------
# Fused PINN forward:  concat(x, t) -> [Linear + tanh]*(L-1) -> Linear
# ---------------------------------------------------------------------------
def pinn_forward(params, x, t, *, tile_rows=512):
    n, dx = x.shape
    _, dt = t.shape
    num_layers = len(params)
    out_dim = params[-1][0].shape[0]

    # Pre-transpose + zero-pad weights once (wrapper glue, outside the kernel).
    flat_wb = []
    in_specs = [None, None]  # placeholders for x, t (filled after tm is known)
    for i, (w, b) in enumerate(params):
        o_d, i_d = w.shape
        in_pad = _round_up(i_d, SUBLANE) if i == 0 else _round_up(i_d, LANE)
        out_pad = _round_up(o_d, LANE)
        wt = jnp.pad(w.T.astype(jnp.float32), ((0, in_pad - i_d), (0, out_pad - o_d)))
        bp = jnp.pad(b.astype(jnp.float32), (0, out_pad - o_d)).reshape(1, out_pad)
        flat_wb.extend([wt, bp])

    # Batch tiling: whole (padded) batch as one tile when small, else grid it.
    if n <= tile_rows:
        tm = _round_up(max(n, SUBLANE), SUBLANE)
    else:
        tm = tile_rows
    n_pad = _round_up(n, tm)
    xp = jnp.pad(x.astype(jnp.float32), ((0, n_pad - n), (0, 0)))
    tp = jnp.pad(t.astype(jnp.float32), ((0, n_pad - n), (0, 0)))

    in_specs = [
        pl.BlockSpec((tm, dx), lambda i: (i, 0)),
        pl.BlockSpec((tm, dt), lambda i: (i, 0)),
    ]
    for arr in flat_wb:
        # Weights/biases are tiny: full-array blocks, VMEM-resident across grid.
        in_specs.append(pl.BlockSpec(arr.shape, lambda i: (0, 0)))

    out_pad_last = flat_wb[-2].shape[1]
    grid = (n_pad // tm,)

    out = pl.pallas_call(
        functools.partial(
            _pinn_fused_kernel, num_layers=num_layers, dx=dx, dt=dt
        ),
        out_shape=jax.ShapeDtypeStruct((n_pad, out_pad_last), jnp.float32),
        grid=grid,
        in_specs=in_specs,
        out_specs=pl.BlockSpec((tm, out_pad_last), lambda i: (i, 0)),
        compiler_params=pltpu.CompilerParams(
            dimension_semantics=("parallel",),
        ),
    )(xp, tp, *flat_wb)

    # Strip batch / lane padding.
    return out[:n, :out_dim]


# ---------------------------------------------------------------------------
# Pure-JAX reference
# ---------------------------------------------------------------------------
def pinn_forward_ref(params, x, t):
    inputs = jnp.concatenate([x, t], axis=1)
    for i in range(len(params) - 1):
        w, b = params[i]
        inputs = jnp.tanh(inputs @ w.T + b)
    w, b = params[-1]
    return inputs @ w.T + b


if __name__ == "__main__":
    layers = [2, 32, 32, 1]      # input dim 2 (x concat t), hidden 32, output 1
    batch = 8

    key = jax.random.PRNGKey(0)
    params, kappa = init_pinn_params(layers, key)

    key, kx, kt = jax.random.split(key, 3)
    x = jax.random.normal(kx, (batch, 1), jnp.float32)
    t = jax.random.normal(kt, (batch, 1), jnp.float32)

    out = jax.block_until_ready(pinn_forward(params, x, t))
    ref = jax.block_until_ready(pinn_forward_ref(params, x, t))

    assert out.shape == (batch, 1), out.shape
    assert jnp.allclose(out, ref, atol=1e-5, rtol=1e-5), jnp.max(jnp.abs(out - ref))
    print("KERNEL_OK")
</pallas_src>

<mosaic_0001>
module attributes {stable_mosaic.version = 11 : i64} {
  func.func @_pinn_fused_kernel(%arg0: i32, %arg1: memref<8x1xf32, #tpu.memory_space<vmem>>, %arg2: memref<8x1xf32, #tpu.memory_space<vmem>>, %arg3: memref<8x128xf32, #tpu.memory_space<vmem>>, %arg4: memref<1x128xf32, #tpu.memory_space<vmem>>, %arg5: memref<128x128xf32, #tpu.memory_space<vmem>>, %arg6: memref<1x128xf32, #tpu.memory_space<vmem>>, %arg7: memref<128x128xf32, #tpu.memory_space<vmem>>, %arg8: memref<1x128xf32, #tpu.memory_space<vmem>>, %arg9: memref<8x128xf32, #tpu.memory_space<vmem>>) attributes {dimension_semantics = [#tpu.dimension_semantics<parallel>], iteration_bounds = array<i64: 1>, scalar_prefetch = 0 : i64, scratch_operands = 0 : i64, tpu.core_type = #tpu.core_type<tc>, window_params = [{transform_indices = @transform_0, window_bounds = array<i64: 8, 1>}, {transform_indices = @transform_1, window_bounds = array<i64: 8, 1>}, {pipeline_mode = #tpu.pipeline_mode<synchronous>, transform_indices = @transform_2, window_bounds = array<i64: 8, 128>}, {pipeline_mode = #tpu.pipeline_mode<synchronous>, transform_indices = @transform_3, window_bounds = array<i64: 1, 128>}, {pipeline_mode = #tpu.pipeline_mode<synchronous>, transform_indices = @transform_4, window_bounds = array<i64: 128, 128>}, {pipeline_mode = #tpu.pipeline_mode<synchronous>, transform_indices = @transform_5, window_bounds = array<i64: 1, 128>}, {pipeline_mode = #tpu.pipeline_mode<synchronous>, transform_indices = @transform_6, window_bounds = array<i64: 128, 128>}, {pipeline_mode = #tpu.pipeline_mode<synchronous>, transform_indices = @transform_7, window_bounds = array<i64: 1, 128>}, {transform_indices = @transform_8, window_bounds = array<i64: 8, 128>}]} {
    %c0 = arith.constant 0 : index
    %c0_0 = arith.constant 0 : index
    %0 = vector.load %arg4[%c0, %c0_0] : memref<1x128xf32, #tpu.memory_space<vmem>>, vector<1x128xf32>
    %c0_1 = arith.constant 0 : index
    %c0_2 = arith.constant 0 : index
    %1 = vector.load %arg1[%c0_1, %c0_2] : memref<8x1xf32, #tpu.memory_space<vmem>>, vector<8x1xf32>
    %c0_3 = arith.constant 0 : index
    %c0_4 = arith.constant 0 : index
    %2 = vector.load %arg3[%c0_3, %c0_4] : memref<8x128xf32, #tpu.memory_space<vmem>>, vector<1x128xf32>
    %3 = vector.broadcast %1 : vector<8x1xf32> to vector<8x128xf32>
    %4 = vector.broadcast %2 : vector<1x128xf32> to vector<8x128xf32>
    %5 = arith.mulf %3, %4 : vector<8x128xf32>
    %6 = vector.broadcast %0 : vector<1x128xf32> to vector<8x128xf32>
    %7 = arith.addf %6, %5 : vector<8x128xf32>
    %c0_5 = arith.constant 0 : index
    %c0_6 = arith.constant 0 : index
    %8 = vector.load %arg2[%c0_5, %c0_6] : memref<8x1xf32, #tpu.memory_space<vmem>>, vector<8x1xf32>
    %c1 = arith.constant 1 : index
    %c0_7 = arith.constant 0 : index
    %9 = vector.load %arg3[%c1, %c0_7] : memref<8x128xf32, #tpu.memory_space<vmem>>, vector<1x128xf32>
    %10 = vector.broadcast %8 : vector<8x1xf32> to vector<8x128xf32>
    %11 = vector.broadcast %9 : vector<1x128xf32> to vector<8x128xf32>
    %12 = arith.mulf %10, %11 : vector<8x128xf32>
    %13 = arith.addf %7, %12 : vector<8x128xf32>
    %14 = math.tanh %13 : vector<8x128xf32>
    %c0_8 = arith.constant 0 : index
    %c0_9 = arith.constant 0 : index
    %15 = vector.load %arg5[%c0_8, %c0_9] : memref<128x128xf32, #tpu.memory_space<vmem>>, vector<128x128xf32>
    %cst = arith.constant dense<0.000000e+00> : vector<8x128xf32>
    %16 = tpu.matmul %14, %15, %cst {dimension_numbers = #tpu.dot_dimension_numbers<[1], [0], [0], [1], [0, 0, 1, 1], [], []>} : vector<8x128xf32>, vector<128x128xf32>, vector<8x128xf32> -> vector<8x128xf32>
    %c0_10 = arith.constant 0 : index
    %c0_11 = arith.constant 0 : index
    %17 = vector.load %arg6[%c0_10, %c0_11] : memref<1x128xf32, #tpu.memory_space<vmem>>, vector<1x128xf32>
    %18 = vector.broadcast %17 : vector<1x128xf32> to vector<8x128xf32>
    %19 = arith.addf %16, %18 : vector<8x128xf32>
    %20 = math.tanh %19 : vector<8x128xf32>
    %c0_12 = arith.constant 0 : index
    %c0_13 = arith.constant 0 : index
    %21 = vector.load %arg7[%c0_12, %c0_13] : memref<128x128xf32, #tpu.memory_space<vmem>>, vector<128x128xf32>
    %cst_14 = arith.constant dense<0.000000e+00> : vector<8x128xf32>
    %22 = tpu.matmul %20, %21, %cst_14 {dimension_numbers = #tpu.dot_dimension_numbers<[1], [0], [0], [1], [0, 0, 1, 1], [], []>} : vector<8x128xf32>, vector<128x128xf32>, vector<8x128xf32> -> vector<8x128xf32>
    %c0_15 = arith.constant 0 : index
    %c0_16 = arith.constant 0 : index
    %23 = vector.load %arg8[%c0_15, %c0_16] : memref<1x128xf32, #tpu.memory_space<vmem>>, vector<1x128xf32>
    %24 = vector.broadcast %23 : vector<1x128xf32> to vector<8x128xf32>
    %25 = arith.addf %22, %24 : vector<8x128xf32>
    %c0_17 = arith.constant 0 : index
    %c0_18 = arith.constant 0 : index
    %26 = vector.load %arg9[%c0_17, %c0_18] : memref<8x128xf32, #tpu.memory_space<vmem>>, vector<8x128xf32>
    tpu.vector_store %arg9[%c0_17, %c0_18], %25 {strides = array<i32>} : memref<8x128xf32, #tpu.memory_space<vmem>>, vector<8x128xf32>,
    return
  }
  func.func @transform_0(%arg0: i32) -> (i32, i32) {
    %c0_i32 = arith.constant 0 : i32
    %c0_i32_0 = arith.constant 0 : i32
    return %arg0, %c0_i32 : i32, i32
  }
  func.func @transform_1(%arg0: i32) -> (i32, i32) {
    %c0_i32 = arith.constant 0 : i32
    %c0_i32_0 = arith.constant 0 : i32
    return %arg0, %c0_i32 : i32, i32
  }
  func.func @transform_2(%arg0: i32) -> (i32, i32) {
    %c0_i32 = arith.constant 0 : i32
    %c0_i32_0 = arith.constant 0 : i32
    %c0_i32_1 = arith.constant 0 : i32
    return %c0_i32, %c0_i32_0 : i32, i32
  }
  func.func @transform_3(%arg0: i32) -> (i32, i32) {
    %c0_i32 = arith.constant 0 : i32
    %c0_i32_0 = arith.constant 0 : i32
    %c0_i32_1 = arith.constant 0 : i32
    return %c0_i32, %c0_i32_0 : i32, i32
  }
  func.func @transform_4(%arg0: i32) -> (i32, i32) {
    %c0_i32 = arith.constant 0 : i32
    %c0_i32_0 = arith.constant 0 : i32
    %c0_i32_1 = arith.constant 0 : i32
    return %c0_i32, %c0_i32_0 : i32, i32
  }
  func.func @transform_5(%arg0: i32) -> (i32, i32) {
    %c0_i32 = arith.constant 0 : i32
    %c0_i32_0 = arith.constant 0 : i32
    %c0_i32_1 = arith.constant 0 : i32
    return %c0_i32, %c0_i32_0 : i32, i32
  }
  func.func @transform_6(%arg0: i32) -> (i32, i32) {
    %c0_i32 = arith.constant 0 : i32
    %c0_i32_0 = arith.constant 0 : i32
    %c0_i32_1 = arith.constant 0 : i32
    return %c0_i32, %c0_i32_0 : i32, i32
  }
  func.func @transform_7(%arg0: i32) -> (i32, i32) {
    %c0_i32 = arith.constant 0 : i32
    %c0_i32_0 = arith.constant 0 : i32
    %c0_i32_1 = arith.constant 0 : i32
    return %c0_i32, %c0_i32_0 : i32, i32
  }
  func.func @transform_8(%arg0: i32) -> (i32, i32) {
    %c0_i32 = arith.constant 0 : i32
    %c0_i32_0 = arith.constant 0 : i32
    return %arg0, %c0_i32 : i32, i32
  }
}

</mosaic_0001>

<llo_original>
// kernel: tpu_custom_call.1
$region0: #{tpu_custom_call.1}
  #allocation0 [shape = 'u32[]', space=smem, size = 0x4, offset = 0x4, fixed_abs, tag = 'smem constant byte address 0x4 - core index']
  #allocation1 [shape = 'u32[144,128]{1,0:T(1,128)}', space=vmem, size = 0x12000, scoped, tag = 'internal scratch']
  %s0 = inlined_call_operand.vmem [shape: f32[8,1], index: 0, kind: input, shape index: {}]
  %s1 = inlined_call_operand.vmem [shape: f32[8,1], index: 1, kind: input, shape index: {}]
  %s2 = inlined_call_operand.vmem [shape: f32[8,128], index: 2, kind: input, shape index: {}]
  %s3 = inlined_call_operand.vmem [shape: f32[1,128], index: 3, kind: input, shape index: {}]
  %s4 = inlined_call_operand.hbm [shape: f32[128,128], index: 4, kind: input, shape index: {}]
  %s5 = inlined_call_operand.vmem [shape: f32[1,128], index: 5, kind: input, shape index: {}]
  %s6 = inlined_call_operand.hbm [shape: f32[128,128], index: 6, kind: input, shape index: {}]
  %s7 = inlined_call_operand.vmem [shape: f32[1,128], index: 7, kind: input, shape index: {}]
  %s8 = inlined_call_operand.hbm [shape: f32[8,128], index: 8, kind: output, shape index: {}]
  %s9 = sld [smem:[#allocation0]]
  $region50: #{tpu_custom_call.1} parent=0
    _
  %s11 = ssub.s32 1, %s9
  %s12 = scalar_select 0, %s11, %s9
  $region1: #{tpu_custom_call.1} parent=0
    #allocation2 [shape = 'u8[65536]{0}', space=vmem, size = 0x10000, scoped, tag = 'input window, operand 4, single buffered']
    #allocation3 [shape = 's32[1]{0}', space=sflag, size = 0x4, scoped, tag = 'scoped memory for tpu_custom_call.1']
    #allocation4 [shape = 's32[1]{0}', space=sflag, size = 0x4, scoped, tag = 'scoped memory for tpu_custom_call.1']
    #allocation5 [shape = 'u8[65536]{0}', space=vmem, size = 0x10000, scoped, tag = 'input window, operand 6, single buffered']
    #allocation6 [shape = 's32[1]{0}', space=sflag, size = 0x4, scoped, tag = 'scoped memory for tpu_custom_call.1']
    #allocation7 [shape = 'u8[4096]{0}', space=vmem, size = 0x1000, scoped, tag = 'output window, operand 0, single buffered']
    %13 = vsyncpa [#allocation3], 0
    %14 = vsyncpa [#allocation6], 0
    %15 = vsyncpa [#allocation4], 0
    // Predicated region
    $region2: #{tpu_custom_call.1} parent=1 // pred_check
      _
    $region3: #{tpu_custom_call.1} parent=1 // pred_check_branch
      %17 = sbr.rel (0) target = $region5
    $region4: #{tpu_custom_call.1} parent=1 // pred_region
      _
    $region5: #{tpu_custom_call.1} parent=1 // pred_fallthru
      _
    // Predicated region
    $region6: #{tpu_custom_call.1} parent=1 // pred_check
      _
    $region7: #{tpu_custom_call.1} parent=1 // pred_check_branch
      %19 = sbr.rel (0) target = $region9
    $region8: #{tpu_custom_call.1} parent=1 // pred_region
      _
    $region9: #{tpu_custom_call.1} parent=1 // pred_fallthru
      _
    // Predicated region
    $region10: #{tpu_custom_call.1} parent=1 // pred_check
      _
    $region11: #{tpu_custom_call.1} parent=1 // pred_check_branch
      %21 = sbr.rel (0) target = $region13
    $region12: #{tpu_custom_call.1} parent=1 // pred_region
      _
    $region13: #{tpu_custom_call.1} parent=1 // pred_fallthru
      _
    // Predicated region
    $region14: #{tpu_custom_call.1} parent=1 // pred_check
      _
    $region15: #{tpu_custom_call.1} parent=1 // pred_check_branch
      %23 = sbr.rel (0) target = $region17
    $region16: #{tpu_custom_call.1} parent=1 // pred_region
      _
    $region17: #{tpu_custom_call.1} parent=1 // pred_fallthru
      _
    // Predicated region
    $region18: #{tpu_custom_call.1} parent=1 // pred_check
      _
    $region19: #{tpu_custom_call.1} parent=1 // pred_check_branch
      %25 = sbr.rel (0) target = $region21
    $region20: #{tpu_custom_call.1} parent=1 // pred_region
      %s27 = ssub.s32 2048, 2048
      %28 = vsyncadd [#allocation3], %s27
      %s29 = sshll.u32 [#allocation2], 4
      %s30 = int_to_ptr.vmem [resolvable:$true] %s29
      %35 = dma.hbm_to_vmem [thread:$0]  %s4, 2048, %s30, [#allocation3], 128, 128, 8
    $region21: #{tpu_custom_call.1} parent=1 // pred_fallthru
      _
    // Predicated region
    $region22: #{tpu_custom_call.1} parent=1 // pred_check
      _
    $region23: #{tpu_custom_call.1} parent=1 // pred_check_branch
      %37 = sbr.rel (0) target = $region25
    $region24: #{tpu_custom_call.1} parent=1 // pred_region
      _
    $region25: #{tpu_custom_call.1} parent=1 // pred_fallthru
      _
    // Predicated region
    $region26: #{tpu_custom_call.1} parent=1 // pred_check
      _
    $region27: #{tpu_custom_call.1} parent=1 // pred_check_branch
      %39 = sbr.rel (0) target = $region29
    $region28: #{tpu_custom_call.1} parent=1 // pred_region
      %s41 = ssub.s32 2048, 2048
      %42 = vsyncadd [#allocation6], %s41
      %s43 = sshll.u32 [#allocation5], 4
      %s44 = int_to_ptr.vmem [resolvable:$true] %s43
      %49 = dma.hbm_to_vmem [thread:$0]  %s6, 2048, %s44, [#allocation6], 128, 128, 8
    $region29: #{tpu_custom_call.1} parent=1 // pred_fallthru
      _
    // Predicated region
    $region30: #{tpu_custom_call.1} parent=1 // pred_check
      _
    $region31: #{tpu_custom_call.1} parent=1 // pred_check_branch
      %51 = sbr.rel (0) target = $region33
    $region32: #{tpu_custom_call.1} parent=1 // pred_region
      _
    $region33: #{tpu_custom_call.1} parent=1 // pred_fallthru
      _
    // Predicated region
    $region34: #{tpu_custom_call.1} parent=1 // pred_check
      _
    $region35: #{tpu_custom_call.1} parent=1 // pred_check_branch
      %53 = sbr.rel (0) target = $region37
    $region36: #{tpu_custom_call.1} parent=1 // pred_region
      %54 = dma.done [#allocation3], 2048
    $region37: #{tpu_custom_call.1} parent=1 // pred_fallthru
      _
    // Predicated region
    $region38: #{tpu_custom_call.1} parent=1 // pred_check
      _
    $region39: #{tpu_custom_call.1} parent=1 // pred_check_branch
      %56 = sbr.rel (0) target = $region41
    $region40: #{tpu_custom_call.1} parent=1 // pred_region
      %57 = dma.done [#allocation6], 2048
    $region41: #{tpu_custom_call.1} parent=1 // pred_fallthru
      _
    %v58 = vld [vmem:[%s3] sm:$0x1]
    %v59 = vld [vmem:[%s0] sm:$0xff]
    %v60 = vld [vmem:[%s2] sm:$0x1]
    %62 = vset.pattern.permute.xlu0 0
    %63 = vperm.xlu0 %62, %v59
    %v64 = vpop.permute.xlu0 %63
    %v66 = vlaneseq
    %v67 = vshrl.u32 %v66, 7
    %v68 = vsub.s32 0, %v67
    %v69 = vrot.slane %v60, %v68
    %v70 = vmul.f32 %v64, %v69
    %v72 = vlaneseq
    %v73 = vshrl.u32 %v72, 7
    %v74 = vsub.s32 0, %v73
    %v75 = vrot.slane %v58, %v74
    %v77 = vadd.f32 %v75, %v70
    %v78 = vld [vmem:[%s1] sm:$0xff]
    %v79 = vld [vmem:[%s2 + $0x1] sm:$0x1]
    %81 = vset.pattern.permute.xlu0 0
    %82 = vperm.xlu0 %81, %v78
    %v83 = vpop.permute.xlu0 %82
    %v85 = vlaneseq
    %v86 = vshrl.u32 %v85, 7
    %v87 = vsub.s32 0, %v86
    %v88 = vrot.slane %v79, %v87
    %v89 = vmul.f32 %v83, %v88
    %v90 = vadd.f32 %v77, %v89
    %v91 = vtanh.pop %v90
    %v92 = vld [vmem:[#allocation2] sm:$0xff]
    %v93 = vld [vmem:[#allocation2 + $0x8] sm:$0xff]
    %v94 = vld [vmem:[#allocation2 + $0x10] sm:$0xff]
    %v95 = vld [vmem:[#allocation2 + $0x18] sm:$0xff]
    %v96 = vld [vmem:[#allocation2 + $0x20] sm:$0xff]
    %v97 = vld [vmem:[#allocation2 + $0x28] sm:$0xff]
    %v98 = vld [vmem:[#allocation2 + $0x30] sm:$0xff]
    %v99 = vld [vmem:[#allocation2 + $0x38] sm:$0xff]
    %v100 = vld [vmem:[#allocation2 + $0x40] sm:$0xff]
    %v101 = vld [vmem:[#allocation2 + $0x48] sm:$0xff]
    %v102 = vld [vmem:[#allocation2 + $0x50] sm:$0xff]
    %v103 = vld [vmem:[#allocation2 + $0x58] sm:$0xff]
    %v104 = vld [vmem:[#allocation2 + $0x60] sm:$0xff]
    %v105 = vld [vmem:[#allocation2 + $0x68] sm:$0xff]
    %v106 = vld [vmem:[#allocation2 + $0x70] sm:$0xff]
    %v107 = vld [vmem:[#allocation2 + $0x78] sm:$0xff]
    %v108 = vld [vmem:[%s5] sm:$0x1]
    %v110 = vlaneseq
    %v111 = vshrl.u32 %v110, 7
    %v112 = vsub.s32 0, %v111
    %v113 = vrot.slane %v108, %v112
    %115 = vmatprep.subr.mxu0 0.0
    %116 = vmatpush1.msra.mxu0 %v92
    %117 = vmatprep.subr.mxu0 0.0
    %118 = vmatpush1.msra.mxu0 %v93
    %119 = vmatprep.subr.mxu0 0.0
    %120 = vmatpush1.msra.mxu0 %v94
    %121 = vmatprep.subr.mxu0 0.0
    %122 = vmatpush1.msra.mxu0 %v95
    %123 = vmatprep.subr.mxu0 0.0
    %124 = vmatpush1.msra.mxu0 %v96
    %125 = vmatprep.subr.mxu0 0.0
    %126 = vmatpush1.msra.mxu0 %v97
    %127 = vmatprep.subr.mxu0 0.0
    %128 = vmatpush1.msra.mxu0 %v98
    %129 = vmatprep.subr.mxu0 0.0
    %130 = vmatpush1.msra.mxu0 %v99
    %131 = vmatprep.subr.mxu0 0.0
    %132 = vmatpush1.msra.mxu0 %v100
    %133 = vmatprep.subr.mxu0 0.0
    %134 = vmatpush1.msra.mxu0 %v101
    %135 = vmatprep.subr.mxu0 0.0
    %136 = vmatpush1.msra.mxu0 %v102
    %137 = vmatprep.subr.mxu0 0.0
    %138 = vmatpush1.msra.mxu0 %v103
    %139 = vmatprep.subr.mxu0 0.0
    %140 = vmatpush1.msra.mxu0 %v104
    %141 = vmatprep.subr.mxu0 0.0
    %142 = vmatpush1.msra.mxu0 %v105
    %143 = vmatprep.subr.mxu0 0.0
    %144 = vmatpush1.msra.mxu0 %v106
    %145 = vmatprep.subr.mxu0 0.0
    %146 = vmatpush1.msra.mxu0 %v107
    %147 = vmatprep.subr.mxu0 0.0
    %148 = vmatpush1.msra.mxu0 0.0
    %149 = vmatprep.subr.mxu0 0.0
    %150 = vmatpush1.msra.mxu0 0.0
    %151 = vmatprep.subr.mxu0 0.0
    %152 = vmatpush1.msra.mxu0 0.0
    %153 = vmatprep.subr.mxu0 0.0
    %154 = vmatpush1.msra.mxu0 0.0
    %155 = vmatprep.subr.mxu0 0.0
    %156 = vmatpush1.msra.mxu0 0.0
    %157 = vmatprep.subr.mxu0 0.0
    %158 = vmatpush1.msra.mxu0 0.0
    %159 = vmatprep.subr.mxu0 0.0
    %160 = vmatpush1.msra.mxu0 0.0
    %161 = vmatprep.subr.mxu0 0.0
    %162 = vmatpush1.msra.mxu0 0.0
    %163 = vmatprep.subr.mxu0 0.0
    %164 = vmatpush1.msra.mxu0 0.0
    %165 = vmatprep.subr.mxu0 0.0
    %166 = vmatpush1.msra.mxu0 0.0
    %167 = vmatprep.subr.mxu0 0.0
    %168 = vmatpush1.msra.mxu0 0.0
    %169 = vmatprep.subr.mxu0 0.0
    %170 = vmatpush1.msra.mxu0 0.0
    %171 = vmatprep.subr.mxu0 0.0
    %172 = vmatpush1.msra.mxu0 0.0
    %173 = vmatprep.subr.mxu0 0.0
    %174 = vmatpush1.msra.mxu0 0.0
    %175 = vmatprep.subr.mxu0 0.0
    %176 = vmatpush1.msra.mxu0 0.0
    %177 = vmatprep.subr.mxu0 0.0
    %178 = vmatpush1.msra.mxu0 0.0
    %179 = vmatprep.mubr.f32.mxu0 0.0
    %180 = vmatmul.mubr.f32.gmra.mrb[0].mxu0 %v91
    %v181 = vpop.f32.mrb[0].mxu0
    %v182 = vadd.f32 %v113, %v181
    %v183 = vpop.f32.mrb[0].mxu0
    %184 = vdwg.mxu0
    %v185 = vtanh.pop %v182
    %v186 = vld [vmem:[#allocation5] sm:$0xff]
    %v187 = vld [vmem:[#allocation5 + $0x8] sm:$0xff]
    %v188 = vld [vmem:[#allocation5 + $0x10] sm:$0xff]
    %v189 = vld [vmem:[#allocation5 + $0x18] sm:$0xff]
    %v190 = vld [vmem:[#allocation5 + $0x20] sm:$0xff]
    %v191 = vld [vmem:[#allocation5 + $0x28] sm:$0xff]
    %v192 = vld [vmem:[#allocation5 + $0x30] sm:$0xff]
    %v193 = vld [vmem:[#allocation5 + $0x38] sm:$0xff]
    %v194 = vld [vmem:[#allocation5 + $0x40] sm:$0xff]
    %v195 = vld [vmem:[#allocation5 + $0x48] sm:$0xff]
    %v196 = vld [vmem:[#allocation5 + $0x50] sm:$0xff]
    %v197 = vld [vmem:[#allocation5 + $0x58] sm:$0xff]
    %v198 = vld [vmem:[#allocation5 + $0x60] sm:$0xff]
    %v199 = vld [vmem:[#allocation5 + $0x68] sm:$0xff]
    %v200 = vld [vmem:[#allocation5 + $0x70] sm:$0xff]
    %v201 = vld [vmem:[#allocation5 + $0x78] sm:$0xff]
    %v202 = vld [vmem:[%s7] sm:$0x1]
    %v204 = vlaneseq
    %v205 = vshrl.u32 %v204, 7
    %v206 = vsub.s32 0, %v205
    %v207 = vrot.slane %v202, %v206
    %209 = vmatprep.subr.mxu0 0.0
    %210 = vmatpush1.msra.mxu0 %v186
    %211 = vmatprep.subr.mxu0 0.0
    %212 = vmatpush1.msra.mxu0 %v187
    %213 = vmatprep.subr.mxu0 0.0
    %214 = vmatpush1.msra.mxu0 %v188
    %215 = vmatprep.subr.mxu0 0.0
    %216 = vmatpush1.msra.mxu0 %v189
    %217 = vmatprep.subr.mxu0 0.0
    %218 = vmatpush1.msra.mxu0 %v190
    %219 = vmatprep.subr.mxu0 0.0
    %220 = vmatpush1.msra.mxu0 %v191
    %221 = vmatprep.subr.mxu0 0.0
    %222 = vmatpush1.msra.mxu0 %v192
    %223 = vmatprep.subr.mxu0 0.0
    %224 = vmatpush1.msra.mxu0 %v193
    %225 = vmatprep.subr.mxu0 0.0
    %226 = vmatpush1.msra.mxu0 %v194
    %227 = vmatprep.subr.mxu0 0.0
    %228 = vmatpush1.msra.mxu0 %v195
    %229 = vmatprep.subr.mxu0 0.0
    %230 = vmatpush1.msra.mxu0 %v196
    %231 = vmatprep.subr.mxu0 0.0
    %232 = vmatpush1.msra.mxu0 %v197
    %233 = vmatprep.subr.mxu0 0.0
    %234 = vmatpush1.msra.mxu0 %v198
    %235 = vmatprep.subr.mxu0 0.0
    %236 = vmatpush1.msra.mxu0 %v199
    %237 = vmatprep.subr.mxu0 0.0
    %238 = vmatpush1.msra.mxu0 %v200
    %239 = vmatprep.subr.mxu0 0.0
    %240 = vmatpush1.msra.mxu0 %v201
    %241 = vmatprep.subr.mxu0 0.0
    %242 = vmatpush1.msra.mxu0 0.0
    %243 = vmatprep.subr.mxu0 0.0
    %244 = vmatpush1.msra.mxu0 0.0
    %245 = vmatprep.subr.mxu0 0.0
    %246 = vmatpush1.msra.mxu0 0.0
    %247 = vmatprep.subr.mxu0 0.0
    %248 = vmatpush1.msra.mxu0 0.0
    %249 = vmatprep.subr.mxu0 0.0
    %250 = vmatpush1.msra.mxu0 0.0
    %251 = vmatprep.subr.mxu0 0.0
    %252 = vmatpush1.msra.mxu0 0.0
    %253 = vmatprep.subr.mxu0 0.0
    %254 = vmatpush1.msra.mxu0 0.0
    %255 = vmatprep.subr.mxu0 0.0
    %256 = vmatpush1.msra.mxu0 0.0
    %257 = vmatprep.subr.mxu0 0.0
    %258 = vmatpush1.msra.mxu0 0.0
    %259 = vmatprep.subr.mxu0 0.0
    %260 = vmatpush1.msra.mxu0 0.0
    %261 = vmatprep.subr.mxu0 0.0
    %262 = vmatpush1.msra.mxu0 0.0
    %263 = vmatprep.subr.mxu0 0.0
    %264 = vmatpush1.msra.mxu0 0.0
    %265 = vmatprep.subr.mxu0 0.0
    %266 = vmatpush1.msra.mxu0 0.0
    %267 = vmatprep.subr.mxu0 0.0
    %268 = vmatpush1.msra.mxu0 0.0
    %269 = vmatprep.subr.mxu0 0.0
    %270 = vmatpush1.msra.mxu0 0.0
    %271 = vmatprep.subr.mxu0 0.0
    %272 = vmatpush1.msra.mxu0 0.0
    %273 = vmatprep.mubr.f32.mxu0 0.0
    %274 = vmatmul.mubr.f32.gmra.mrb[0].mxu0 %v185
    %v275 = vpop.f32.mrb[0].mxu0
    %v276 = vadd.f32 %v207, %v275
    %v277 = vpop.f32.mrb[0].mxu0
    %278 = vdwg.mxu0
    %279 = vst [vmem:[#allocation7] sm:$0xff] %v276
    // Predicated region
    $region42: #{tpu_custom_call.1} parent=1 // pred_check
      _
    $region43: #{tpu_custom_call.1} parent=1 // pred_check_branch
      %281 = sbr.rel (0) target = $region45
    $region44: #{tpu_custom_call.1} parent=1 // pred_region
      %s283 = ssub.s32 128, 128
      %284 = vsyncadd [#allocation4], %s283
      %s286 = sshll.u32 [#allocation7], 4
      %s287 = int_to_ptr.vmem [resolvable:$true] %s286
      %289 = dma.vmem_to_hbm [thread:$0]  %s287, 128, %s8, [#allocation4]
    $region45: #{tpu_custom_call.1} parent=1 // pred_fallthru
      _
    // Predicated region
    $region46: #{tpu_custom_call.1} parent=1 // pred_check
      _
    $region47: #{tpu_custom_call.1} parent=1 // pred_check_branch
      %291 = sbr.rel (0) target = $region49
    $region48: #{tpu_custom_call.1} parent=1 // pred_region
      %292 = dma.done [#allocation4], 128
    $region49: #{tpu_custom_call.1} parent=1 // pred_fallthru
      _
    %293 = vsyncpa [#allocation3], 1
    %294 = vsyncpa [#allocation6], 1
    %295 = vsyncpa [#allocation4], 1

</llo_original>
